<compile_context>
chip_gen: v5e
topology: v5e:2x2
jax: 0.10.0
libtpu: 0.0.40
codegen_flags: <defaults>
</compile_context>

<pallas_src>
import functools

import jax
import jax.numpy as jnp
from jax.experimental import pallas as pl
from jax.experimental.pallas import tpu as pltpu


def _round_up(x: int, m: int) -> int:
    return ((x + m - 1) // m) * m


# --------------------------------------------------------------------------
# Chip introspection
# --------------------------------------------------------------------------
@functools.lru_cache(maxsize=None)
def _chip_info():
    """Returns (vmem_capacity_bytes, num_tensorcores, mxu_dim, has_bf16_vpu)."""
    kind = ""
    try:
        kind = jax.devices()[0].device_kind.lower()
    except Exception:
        pass
    if "v7" in kind:
        num_tc, mxu, bf16_vpu, default_cap = 2, 256, True, 64 << 20
    elif "v6" in kind:
        num_tc, mxu, bf16_vpu, default_cap = 1, 256, True, 128 << 20
    elif "v5" in kind and ("lite" in kind or "5e" in kind):
        num_tc, mxu, bf16_vpu, default_cap = 1, 128, False, 128 << 20
    else:  # unknown / older chips: conservative defaults (perf-only)
        num_tc, mxu, bf16_vpu, default_cap = 1, 128, False, 128 << 20
    cap = default_cap
    try:
        cap = int(pltpu.get_tpu_info().vmem_capacity_bytes)
    except Exception:
        pass
    return cap, num_tc, mxu, bf16_vpu


def _vmem_budget(cap: int) -> int:
    if cap >= (128 << 20):            # v5e / v6e: 128 MiB parts
        return cap - (18 << 20)       # ~110 MiB usable
    return max(cap - (16 << 20), 24 << 20)   # v7x: ~48 MiB per TC


@functools.lru_cache(maxsize=None)
def _single_buffered_weights_supported() -> bool:
    """One-time capability probe: does this Pallas build accept
    pipeline_mode=pl.Buffered(1) for grid-invariant operands?  (Explicit probe
    instead of swallowing exceptions from the real kernel.)"""
    def probe(w_ref, o_ref):
        o_ref[...] = w_ref[...] + 1.0
    try:
        fn = pl.pallas_call(
            probe,
            out_shape=jax.ShapeDtypeStruct((16, 128), jnp.float32),
            grid=(2,),
            in_specs=[pl.BlockSpec((8, 128), lambda i: (0, 0),
                                   pipeline_mode=pl.Buffered(1))],
            out_specs=pl.BlockSpec((8, 128), lambda i: (i, 0)),
        )
        jax.jit(fn).lower(jnp.zeros((8, 128), jnp.float32)).compile()
        return True
    except Exception:
        return False


# --------------------------------------------------------------------------
# Kernels
# --------------------------------------------------------------------------
def _ffnn_resident_kernel(x_ref, w1_ref, b1_ref, w2_ref, b2_ref, w3_ref, b3_ref,
                          o_ref, *, epi_dtype):
    """relu(relu(x@w1+b1)@w2+b2)@w3+b3 for one batch tile; weights resident."""
    h1 = jnp.dot(x_ref[...], w1_ref[...], preferred_element_type=jnp.float32)
    h1 = jnp.maximum(h1.astype(epi_dtype) + b1_ref[...], 0)          # fc1 + ReLU
    h2 = jnp.dot(h1.astype(w2_ref.dtype), w2_ref[...],
                 preferred_element_type=jnp.float32)
    h2 = jnp.maximum(h2.astype(epi_dtype) + b2_ref[...], 0)          # fc2 + ReLU
    out = jnp.dot(h2.astype(w3_ref.dtype), w3_ref[...],
                  preferred_element_type=jnp.float32)                # fc3
    o_ref[...] = (out + b3_ref[...].astype(jnp.float32)).astype(o_ref.dtype)


def _ffnn_streaming_kernel(x_ref, w1_ref, b1_ref, w2_ref, b2_ref, w3_ref, b3_ref,
                           o_ref, h1_ref, acc_ref, *, epi_dtype):
    """Hidden-dim streamed variant: grid = (batch tile i, hidden chunk j).
    w2 column tiles / w3 row tiles are double-buffered by BlockSpec; fc3 is
    accumulated in an f32 VMEM scratch; h1 is computed once per batch tile."""
    j = pl.program_id(1)

    @pl.when(j == 0)
    def _init():
        h1 = jnp.dot(x_ref[...], w1_ref[...], preferred_element_type=jnp.float32)
        h1 = jnp.maximum(h1.astype(epi_dtype) + b1_ref[...], 0)
        h1_ref[...] = h1.astype(h1_ref.dtype)
        acc_ref[...] = jnp.zeros_like(acc_ref)

    h2 = jnp.dot(h1_ref[...], w2_ref[...], preferred_element_type=jnp.float32)
    h2 = jnp.maximum(h2.astype(epi_dtype) + b2_ref[...], 0)
    acc_ref[...] += jnp.dot(h2.astype(w3_ref.dtype), w3_ref[...],
                            preferred_element_type=jnp.float32)

    @pl.when(j == pl.num_programs(1) - 1)
    def _finalize():
        o_ref[...] = (acc_ref[...] +
                      b3_ref[...].astype(jnp.float32)).astype(o_ref.dtype)


# --------------------------------------------------------------------------
# Planner
# --------------------------------------------------------------------------
def _plan_resident(b8, in_p, hid_p, cls_p, ci, ei, oi, wbuf, budget, num_tc,
                   cap, tile_b):
    fixed = wbuf * (ci * (in_p * hid_p + hid_p * hid_p + hid_p * cls_p)
                    + ei * (2 * hid_p + cls_p))

    def per_tile(tb):
        return (2 * tb * in_p * ci            # x tile (double buffered)
                + 2 * tb * cls_p * oi         # out tile (double buffered)
                + tb * hid_p * (4 + ei)       # f32 dot result + epilogue temp
                + tb * cls_p * 4)             # f32 fc3 result

    if tile_b is None:
        tile_b = 8
        for cand in (512, 256, 128, 64, 32, 16, 8):
            tb = min(cand, b8)
            if fixed + per_tile(tb) <= budget:
                tile_b = tb
                break
        # Split the batch across TensorCores only on multi-TC chips (v7x), and
        # only if each core still gets a >=128-row tile (MXU M-fill).
        if num_tc >= 2 and pl.cdiv(b8, tile_b) < num_tc:
            half = (b8 // num_tc) // 128 * 128
            if 128 <= half < tile_b and fixed + per_tile(half) <= budget:
                tile_b = half

    tile_b = min(max(_round_up(tile_b, 8), 8), b8)
    need = fixed + per_tile(tile_b)
    fits = need <= budget
    vmem_limit = int(min(max(need + need // 4 + (4 << 20), 32 << 20),
                         cap - (2 << 20)))
    return tile_b, vmem_limit, fits


def _plan_streaming(b8, in_p, hid_p, cls_p, ci, ei, oi, wbuf, budget, cap,
                    tile_b, tile_h):
    fixed = wbuf * (ci * in_p * hid_p + ei * (hid_p + cls_p))   # w1, b1, b3

    def need(tb, th):
        stream = 2 * (hid_p * th * ci + th * ei + th * cls_p * ci)  # w2/b2/w3
        io = 2 * tb * in_p * ci + 2 * tb * cls_p * oi
        scratch = tb * hid_p * ci + tb * cls_p * 4
        temps = tb * hid_p * 4 + tb * th * (4 + ei)
        return fixed + stream + io + scratch + temps

    th_cands = [c for c in (2048, 1024, 512, 256, 128)
                if c <= hid_p and hid_p % c == 0]
    if not th_cands:
        th_cands = [hid_p]

    if tile_b is not None and tile_h is not None:
        tb, th = tile_b, tile_h
    else:
        tb, th = 8, th_cands[-1]
        done = False
        for tb_c in (512, 256, 128, 64, 32, 16, 8):
            cand_tb = tile_b if tile_b is not None else min(tb_c, b8)
            for th_c in th_cands:
                cand_th = tile_h if tile_h is not None else th_c
                if need(cand_tb, cand_th) <= budget:
                    tb, th = cand_tb, cand_th
                    done = True
                    break
            if done:
                break
        # TODO(synk): if even the smallest config does not fit (w1 itself too
        # large), stream w1's output-column tiles as well.

    tb = min(max(_round_up(tb, 8), 8), b8)
    n = need(tb, th)
    vmem_limit = int(min(max(n + n // 4 + (4 << 20), 32 << 20), cap - (2 << 20)))
    return tb, th, vmem_limit


# --------------------------------------------------------------------------
# Wrappers
# --------------------------------------------------------------------------
def prepare_ffnn_params(w1, b1, w2, b2, w3, b3, *, compute_dtype=jnp.bfloat16,
                        epi_dtype=None, lane_pad=None):
    """Pad feature dims to the MXU lane multiple and cast weights ONCE.
    Reuse the returned (params, meta) across forwards to avoid re-reading and
    re-writing the whole weight set in HBM on every call."""
    _cap, _num_tc, mxu, bf16_vpu = _chip_info()
    if lane_pad is None:
        lane_pad = 256 if mxu >= 256 else 128     # match MXU width (v6e/v7x vs v5e)
    if epi_dtype is None:
        # bf16 bias+ReLU epilogue where the VPU supports it (v6e/v7x); f32 on v5e.
        epi_dtype = jnp.bfloat16 if bf16_vpu else jnp.float32

    input_size, hidden = w1.shape
    num_classes = w3.shape[1]
    in_p = _round_up(input_size, lane_pad)
    hid_p = _round_up(hidden, lane_pad)
    cls_p = _round_up(num_classes, lane_pad)

    def pad2(a, rows, cols, dtype):
        a = jnp.asarray(a, dtype)
        return jnp.pad(a, ((0, rows - a.shape[0]), (0, cols - a.shape[1])))

    params = dict(
        w1=pad2(w1, in_p, hid_p, compute_dtype),
        b1=pad2(b1, 1, hid_p, epi_dtype),
        w2=pad2(w2, hid_p, hid_p, compute_dtype),
        b2=pad2(b2, 1, hid_p, epi_dtype),
        w3=pad2(w3, hid_p, cls_p, compute_dtype),
        b3=pad2(b3, 1, cls_p, epi_dtype),
    )
    meta = dict(input_size=input_size, hidden=hidden, num_classes=num_classes,
                compute_dtype=compute_dtype, epi_dtype=epi_dtype)
    return params, meta


@functools.partial(
    jax.jit,
    static_argnames=("num_classes", "tile_b", "tile_h", "streaming",
                     "single_buffer_weights", "epi_dtype", "compute_dtype",
                     "vmem_limit"))
def _ffnn_apply(x, w1, b1, w2, b2, w3, b3, *, num_classes, tile_b, tile_h,
                streaming, single_buffer_weights, epi_dtype, compute_dtype,
                vmem_limit):
    B, input_size = x.shape
    in_p, hid_p = w1.shape
    cls_p = w3.shape[1]
    out_dtype = x.dtype

    B_p = _round_up(max(B, 1), tile_b)
    xp = jnp.pad(x.astype(compute_dtype),
                 ((0, B_p - B), (0, in_p - input_size)))

    def resident(shape):
        # Grid-invariant operands: block index is always (0, 0); single-buffer
        # them (halves their VMEM footprint) when the build supports it.
        if single_buffer_weights:
            return pl.BlockSpec(shape, lambda *_: (0, 0),
                                pipeline_mode=pl.Buffered(1))
        return pl.BlockSpec(shape, lambda *_: (0, 0))

    cparams = pltpu.CompilerParams(
        dimension_semantics=(("parallel", "arbitrary") if streaming
                             else ("parallel",)),
        vmem_limit_bytes=vmem_limit)

    if streaming:
        grid = (B_p // tile_b, hid_p // tile_h)
        kernel = functools.partial(_ffnn_streaming_kernel, epi_dtype=epi_dtype)
        out_p = pl.pallas_call(
            kernel,
            out_shape=jax.ShapeDtypeStruct((B_p, cls_p), out_dtype),
            grid_spec=pltpu.PrefetchScalarGridSpec(
                num_scalar_prefetch=0,
                grid=grid,
                in_specs=[
                    pl.BlockSpec((tile_b, in_p), lambda i, j: (i, 0)),   # x
                    resident((in_p, hid_p)),                             # w1
                    resident((1, hid_p)),                                # b1
                    pl.BlockSpec((hid_p, tile_h), lambda i, j: (0, j)),  # w2 cols
                    pl.BlockSpec((1, tile_h), lambda i, j: (0, j)),      # b2
                    pl.BlockSpec((tile_h, cls_p), lambda i, j: (j, 0)),  # w3 rows
                    resident((1, cls_p)),                                # b3
                ],
                out_specs=pl.BlockSpec((tile_b, cls_p), lambda i, j: (i, 0)),
                scratch_shapes=[
                    pltpu.VMEM((tile_b, hid_p), compute_dtype),   # h1 cache
                    pltpu.VMEM((tile_b, cls_p), jnp.float32),     # fc3 accumulator
                ],
            ),
            compiler_params=cparams,
        )(xp, w1, b1, w2, b2, w3, b3)
    else:
        grid = (B_p // tile_b,)
        kernel = functools.partial(_ffnn_resident_kernel, epi_dtype=epi_dtype)
        out_p = pl.pallas_call(
            kernel,
            out_shape=jax.ShapeDtypeStruct((B_p, cls_p), out_dtype),
            grid_spec=pltpu.PrefetchScalarGridSpec(
                num_scalar_prefetch=0,
                grid=grid,
                in_specs=[
                    pl.BlockSpec((tile_b, in_p), lambda i: (i, 0)),  # x tile
                    resident((in_p, hid_p)),                         # w1
                    resident((1, hid_p)),                            # b1
                    resident((hid_p, hid_p)),                        # w2
                    resident((1, hid_p)),                            # b2
                    resident((hid_p, cls_p)),                        # w3
                    resident((1, cls_p)),                            # b3
                ],
                out_specs=pl.BlockSpec((tile_b, cls_p), lambda i: (i, 0)),
            ),
            compiler_params=cparams,
        )(xp, w1, b1, w2, b2, w3, b3)

    # Slice off batch / class padding (padded rows/cols are inert).
    return out_p[:B, :num_classes]


def ffnn_forward_prepared(x, params, meta, *, tile_b=None, tile_h=None,
                          force_streaming=False):
    cap, num_tc, _mxu, _bf16 = _chip_info()
    budget = _vmem_budget(cap)
    in_p, hid_p = params["w1"].shape
    cls_p = params["w3"].shape[1]
    ci = jnp.dtype(meta["compute_dtype"]).itemsize
    ei = jnp.dtype(meta["epi_dtype"]).itemsize
    oi = jnp.dtype(x.dtype).itemsize
    wbuf = 1 if _single_buffered_weights_supported() else 2

    B = x.shape[0]
    b8 = _round_up(max(B, 1), 8)

    res_tile_b, res_vmem, res_fits = _plan_resident(
        b8, in_p, hid_p, cls_p, ci, ei, oi, wbuf, budget, num_tc, cap, tile_b)

    w_bytes = ci * (in_p * hid_p + hid_p * hid_p + hid_p * cls_p)
    streamable = hid_p >= 256
    use_streaming = force_streaming or (not res_fits and streamable)
    if (not use_streaming and streamable and w_bytes >= (16 << 20)
            and pl.cdiv(b8, res_tile_b) <= 2):
        # Small-batch inference with a big weight set: stream w2/w3 so their
        # DMA overlaps fc1/fc2 compute instead of stalling the first step.
        use_streaming = True

    if use_streaming:
        tb, th, vmem_limit = _plan_streaming(
            b8, in_p, hid_p, cls_p, ci, ei, oi, wbuf, budget, cap,
            tile_b, tile_h)
        if hid_p % th != 0:
            raise ValueError(f"tile_h={th} must divide padded hidden dim {hid_p}")
    else:
        tb, th, vmem_limit = res_tile_b, None, res_vmem

    return _ffnn_apply(
        x, params["w1"], params["b1"], params["w2"], params["b2"],
        params["w3"], params["b3"],
        num_classes=meta["num_classes"], tile_b=tb, tile_h=th,
        streaming=use_streaming, single_buffer_weights=(wbuf == 1),
        epi_dtype=meta["epi_dtype"], compute_dtype=meta["compute_dtype"],
        vmem_limit=vmem_limit)


def ffnn_forward(x, w1, b1, w2, b2, w3, b3, *, tile_b=None, tile_h=None,
                 force_streaming=False, compute_dtype=jnp.bfloat16,
                 epi_dtype=None):
    """Convenience wrapper: prepares (pads/casts) the weights and runs one
    forward.  For repeated calls, use prepare_ffnn_params once +
    ffnn_forward_prepared."""
    params, meta = prepare_ffnn_params(w1, b1, w2, b2, w3, b3,
                                       compute_dtype=compute_dtype,
                                       epi_dtype=epi_dtype)
    return ffnn_forward_prepared(x, params, meta, tile_b=tile_b, tile_h=tile_h,
                                 force_streaming=force_streaming)


# --------------------------------------------------------------------------
# Demo / self-test
# --------------------------------------------------------------------------
def init_linear(key, in_features, out_features, dtype=jnp.float32):
    """PyTorch-style init U(-1/sqrt(in), 1/sqrt(in)); W returned as (in, out)."""
    kw, kb = jax.random.split(key)
    bound = 1.0 / (in_features ** 0.5)
    w = jax.random.uniform(kw, (in_features, out_features), dtype, -bound, bound)
    b = jax.random.uniform(kb, (1, out_features), dtype, -bound, bound)
    return w, b


def _reference(x, w1, b1, w2, b2, w3, b3, compute_dtype, epi_dtype):
    """Pure-JAX reference matching the kernel's dtype policy
    (bf16 MXU inputs, f32 accumulation, epi_dtype bias+ReLU epilogue)."""
    cd = compute_dtype
    h1 = jnp.dot(x.astype(cd), w1.astype(cd), preferred_element_type=jnp.float32)
    h1 = jnp.maximum(h1.astype(epi_dtype) + b1.astype(epi_dtype), 0)
    h2 = jnp.dot(h1.astype(cd), w2.astype(cd), preferred_element_type=jnp.float32)
    h2 = jnp.maximum(h2.astype(epi_dtype) + b2.astype(epi_dtype), 0)
    out = jnp.dot(h2.astype(cd), w3.astype(cd), preferred_element_type=jnp.float32)
    return out + b3.astype(jnp.float32)


if __name__ == "__main__":
    key = jax.random.PRNGKey(0)

    # ---- Case 1: weight-resident fused path (small MLP) ----
    B, input_size, hidden, num_classes = 32, 32, 64, 10
    kx, k1, k2, k3, k4 = jax.random.split(key, 5)
    x = jax.random.normal(kx, (B, input_size), jnp.float32)
    w1, b1 = init_linear(k1, input_size, hidden)
    w2, b2 = init_linear(k2, hidden, hidden)
    w3, b3 = init_linear(k3, hidden, num_classes)

    params, meta = prepare_ffnn_params(w1, b1, w2, b2, w3, b3)
    out = jax.block_until_ready(ffnn_forward_prepared(x, params, meta))
    ref = _reference(x, w1, b1, w2, b2, w3, b3,
                     meta["compute_dtype"], meta["epi_dtype"])
    assert out.shape == (B, num_classes)
    assert jnp.allclose(out, ref.astype(out.dtype), atol=2e-2, rtol=2e-2), \
        "resident path mismatch vs reference"

    # ---- Case 2: hidden-dim streaming path (forced, small shapes) ----
    B2, in2, hid2, cls2 = 64, 128, 512, 16
    kx2, k5, k6, k7 = jax.random.split(k4, 4)
    x2 = jax.random.normal(kx2, (B2, in2), jnp.float32)
    w1b, b1b = init_linear(k5, in2, hid2)
    w2b, b2b = init_linear(k6, hid2, hid2)
    w3b, b3b = init_linear(k7, hid2, cls2)

    p2, m2 = prepare_ffnn_params(w1b, b1b, w2b, b2b, w3b, b3b)
    out2 = jax.block_until_ready(
        ffnn_forward_prepared(x2, p2, m2, force_streaming=True, tile_h=256))
    ref2 = _reference(x2, w1b, b1b, w2b, b2b, w3b, b3b,
                      m2["compute_dtype"], m2["epi_dtype"])
    assert out2.shape == (B2, cls2)
    assert jnp.allclose(out2, ref2.astype(out2.dtype), atol=2e-2, rtol=2e-2), \
        "streaming path mismatch vs reference"

    print("KERNEL_OK")
</pallas_src>

<mosaic_0001>
module attributes {stable_mosaic.version = 11 : i64} {
  func.func @_ffnn_resident_kernel(%arg0: i32, %arg1: memref<32x128xbf16, #tpu.memory_space<vmem>>, %arg2: memref<128x128xbf16, #tpu.memory_space<vmem>>, %arg3: memref<1x128xf32, #tpu.memory_space<vmem>>, %arg4: memref<128x128xbf16, #tpu.memory_space<vmem>>, %arg5: memref<1x128xf32, #tpu.memory_space<vmem>>, %arg6: memref<128x128xbf16, #tpu.memory_space<vmem>>, %arg7: memref<1x128xf32, #tpu.memory_space<vmem>>, %arg8: memref<32x128xf32, #tpu.memory_space<vmem>>) attributes {dimension_semantics = [#tpu.dimension_semantics<parallel>], iteration_bounds = array<i64: 1>, scalar_prefetch = 0 : i64, scratch_operands = 0 : i64, tpu.core_type = #tpu.core_type<tc>, window_params = [{transform_indices = @transform_0, window_bounds = array<i64: 32, 128>}, {pipeline_mode = #tpu.pipeline_mode<synchronous>, transform_indices = @transform_1, window_bounds = array<i64: 128, 128>}, {pipeline_mode = #tpu.pipeline_mode<synchronous>, transform_indices = @transform_2, window_bounds = array<i64: 1, 128>}, {pipeline_mode = #tpu.pipeline_mode<synchronous>, transform_indices = @transform_3, window_bounds = array<i64: 128, 128>}, {pipeline_mode = #tpu.pipeline_mode<synchronous>, transform_indices = @transform_4, window_bounds = array<i64: 1, 128>}, {pipeline_mode = #tpu.pipeline_mode<synchronous>, transform_indices = @transform_5, window_bounds = array<i64: 128, 128>}, {pipeline_mode = #tpu.pipeline_mode<synchronous>, transform_indices = @transform_6, window_bounds = array<i64: 1, 128>}, {transform_indices = @transform_7, window_bounds = array<i64: 32, 128>}]} {
    %c0 = arith.constant 0 : index
    %c0_0 = arith.constant 0 : index
    %0 = vector.load %arg1[%c0, %c0_0] : memref<32x128xbf16, #tpu.memory_space<vmem>>, vector<32x128xbf16>
    %c0_1 = arith.constant 0 : index
    %c0_2 = arith.constant 0 : index
    %1 = vector.load %arg2[%c0_1, %c0_2] : memref<128x128xbf16, #tpu.memory_space<vmem>>, vector<128x128xbf16>
    %cst = arith.constant dense<0.000000e+00> : vector<32x128xf32>
    %2 = tpu.matmul %0, %1, %cst {dimension_numbers = #tpu.dot_dimension_numbers<[1], [0], [0], [1], [0, 0, 1, 1], [], []>} : vector<32x128xbf16>, vector<128x128xbf16>, vector<32x128xf32> -> vector<32x128xf32>
    %c0_3 = arith.constant 0 : index
    %c0_4 = arith.constant 0 : index
    %3 = vector.load %arg3[%c0_3, %c0_4] : memref<1x128xf32, #tpu.memory_space<vmem>>, vector<1x128xf32>
    %4 = vector.broadcast %3 : vector<1x128xf32> to vector<32x128xf32>
    %5 = arith.addf %2, %4 : vector<32x128xf32>
    %cst_5 = arith.constant 0.000000e+00 : f32
    %6 = vector.broadcast %cst_5 : f32 to vector<32x128xf32>
    %7 = arith.maximumf %5, %6 : vector<32x128xf32>
    %8 = arith.truncf %7 : vector<32x128xf32> to vector<32x128xbf16>
    %c0_6 = arith.constant 0 : index
    %c0_7 = arith.constant 0 : index
    %9 = vector.load %arg4[%c0_6, %c0_7] : memref<128x128xbf16, #tpu.memory_space<vmem>>, vector<128x128xbf16>
    %cst_8 = arith.constant dense<0.000000e+00> : vector<32x128xf32>
    %10 = tpu.matmul %8, %9, %cst_8 {dimension_numbers = #tpu.dot_dimension_numbers<[1], [0], [0], [1], [0, 0, 1, 1], [], []>} : vector<32x128xbf16>, vector<128x128xbf16>, vector<32x128xf32> -> vector<32x128xf32>
    %c0_9 = arith.constant 0 : index
    %c0_10 = arith.constant 0 : index
    %11 = vector.load %arg5[%c0_9, %c0_10] : memref<1x128xf32, #tpu.memory_space<vmem>>, vector<1x128xf32>
    %12 = vector.broadcast %11 : vector<1x128xf32> to vector<32x128xf32>
    %13 = arith.addf %10, %12 : vector<32x128xf32>
    %cst_11 = arith.constant 0.000000e+00 : f32
    %14 = vector.broadcast %cst_11 : f32 to vector<32x128xf32>
    %15 = arith.maximumf %13, %14 : vector<32x128xf32>
    %16 = arith.truncf %15 : vector<32x128xf32> to vector<32x128xbf16>
    %c0_12 = arith.constant 0 : index
    %c0_13 = arith.constant 0 : index
    %17 = vector.load %arg6[%c0_12, %c0_13] : memref<128x128xbf16, #tpu.memory_space<vmem>>, vector<128x128xbf16>
    %cst_14 = arith.constant dense<0.000000e+00> : vector<32x128xf32>
    %18 = tpu.matmul %16, %17, %cst_14 {dimension_numbers = #tpu.dot_dimension_numbers<[1], [0], [0], [1], [0, 0, 1, 1], [], []>} : vector<32x128xbf16>, vector<128x128xbf16>, vector<32x128xf32> -> vector<32x128xf32>
    %c0_15 = arith.constant 0 : index
    %c0_16 = arith.constant 0 : index
    %19 = vector.load %arg7[%c0_15, %c0_16] : memref<1x128xf32, #tpu.memory_space<vmem>>, vector<1x128xf32>
    %20 = vector.broadcast %19 : vector<1x128xf32> to vector<32x128xf32>
    %21 = arith.addf %18, %20 : vector<32x128xf32>
    %c0_17 = arith.constant 0 : index
    %c0_18 = arith.constant 0 : index
    %22 = vector.load %arg8[%c0_17, %c0_18] : memref<32x128xf32, #tpu.memory_space<vmem>>, vector<32x128xf32>
    tpu.vector_store %arg8[%c0_17, %c0_18], %21 {strides = array<i32>} : memref<32x128xf32, #tpu.memory_space<vmem>>, vector<32x128xf32>,
    return
  }
  func.func @transform_0(%arg0: i32) -> (i32, i32) {
    %c0_i32 = arith.constant 0 : i32
    %c0_i32_0 = arith.constant 0 : i32
    return %arg0, %c0_i32 : i32, i32
  }
  func.func @transform_1(%arg0: i32) -> (i32, i32) {
    %c0_i32 = arith.constant 0 : i32
    %c0_i32_0 = arith.constant 0 : i32
    %c0_i32_1 = arith.constant 0 : i32
    return %c0_i32, %c0_i32_0 : i32, i32
  }
  func.func @transform_2(%arg0: i32) -> (i32, i32) {
    %c0_i32 = arith.constant 0 : i32
    %c0_i32_0 = arith.constant 0 : i32
    %c0_i32_1 = arith.constant 0 : i32
    return %c0_i32, %c0_i32_0 : i32, i32
  }
  func.func @transform_3(%arg0: i32) -> (i32, i32) {
    %c0_i32 = arith.constant 0 : i32
    %c0_i32_0 = arith.constant 0 : i32
    %c0_i32_1 = arith.constant 0 : i32
    return %c0_i32, %c0_i32_0 : i32, i32
  }
  func.func @transform_4(%arg0: i32) -> (i32, i32) {
    %c0_i32 = arith.constant 0 : i32
    %c0_i32_0 = arith.constant 0 : i32
    %c0_i32_1 = arith.constant 0 : i32
    return %c0_i32, %c0_i32_0 : i32, i32
  }
  func.func @transform_5(%arg0: i32) -> (i32, i32) {
    %c0_i32 = arith.constant 0 : i32
    %c0_i32_0 = arith.constant 0 : i32
    %c0_i32_1 = arith.constant 0 : i32
    return %c0_i32, %c0_i32_0 : i32, i32
  }
  func.func @transform_6(%arg0: i32) -> (i32, i32) {
    %c0_i32 = arith.constant 0 : i32
    %c0_i32_0 = arith.constant 0 : i32
    %c0_i32_1 = arith.constant 0 : i32
    return %c0_i32, %c0_i32_0 : i32, i32
  }
  func.func @transform_7(%arg0: i32) -> (i32, i32) {
    %c0_i32 = arith.constant 0 : i32
    %c0_i32_0 = arith.constant 0 : i32
    return %arg0, %c0_i32 : i32, i32
  }
}

</mosaic_0001>

<llo_original>
// kernel: _ffnn_apply.1
$region0: #{_ffnn_apply.1}
  #allocation0 [shape = 'u32[]', space=smem, size = 0x4, offset = 0x4, fixed_abs, tag = 'smem constant byte address 0x4 - core index']
  #allocation1 [shape = 'u32[72,128]{1,0:T(1,128)}', space=vmem, size = 0x9000, scoped, tag = 'internal scratch']
  %s0 = inlined_call_operand.vmem [shape: bf16[32,128], index: 0, kind: input, shape index: {}]
  %s1 = inlined_call_operand.vmem [shape: bf16[128,128], index: 1, kind: input, shape index: {}]
  %s2 = inlined_call_operand.vmem [shape: f32[1,128], index: 2, kind: input, shape index: {}]
  %s3 = inlined_call_operand.hbm [shape: bf16[128,128], index: 3, kind: input, shape index: {}]
  %s4 = inlined_call_operand.vmem [shape: f32[1,128], index: 4, kind: input, shape index: {}]
  %s5 = inlined_call_operand.hbm [shape: bf16[128,128], index: 5, kind: input, shape index: {}]
  %s6 = inlined_call_operand.vmem [shape: f32[1,128], index: 6, kind: input, shape index: {}]
  %s7 = inlined_call_operand.vmem [shape: f32[32,128], index: 7, kind: output, shape index: {}]
  %s8 = sld [smem:[#allocation0]]
  $region46: #{_ffnn_apply.1} parent=0
    _
  %s10 = ssub.s32 1, %s8
  %s11 = scalar_select 0, %s10, %s8
  $region1: #{_ffnn_apply.1} parent=0
    #allocation2 [shape = 'u8[32768]{0}', space=vmem, size = 0x8000, scoped, tag = 'input window, operand 3, single buffered']
    #allocation3 [shape = 's32[1]{0}', space=sflag, size = 0x4, scoped, tag = 'scoped memory for _ffnn_apply.1']
    #allocation4 [shape = 'u8[32768]{0}', space=vmem, size = 0x8000, scoped, tag = 'input window, operand 5, single buffered']
    #allocation5 [shape = 's32[1]{0}', space=sflag, size = 0x4, scoped, tag = 'scoped memory for _ffnn_apply.1']
    %12 = vsyncpa [#allocation3], 0
    %13 = vsyncpa [#allocation5], 0
    // Predicated region
    $region2: #{_ffnn_apply.1} parent=1 // pred_check
      _
    $region3: #{_ffnn_apply.1} parent=1 // pred_check_branch
      %15 = sbr.rel (0) target = $region5
    $region4: #{_ffnn_apply.1} parent=1 // pred_region
      _
    $region5: #{_ffnn_apply.1} parent=1 // pred_fallthru
      _
    // Predicated region
    $region6: #{_ffnn_apply.1} parent=1 // pred_check
      _
    $region7: #{_ffnn_apply.1} parent=1 // pred_check_branch
      %17 = sbr.rel (0) target = $region9
    $region8: #{_ffnn_apply.1} parent=1 // pred_region
      _
    $region9: #{_ffnn_apply.1} parent=1 // pred_fallthru
      _
    // Predicated region
    $region10: #{_ffnn_apply.1} parent=1 // pred_check
      _
    $region11: #{_ffnn_apply.1} parent=1 // pred_check_branch
      %19 = sbr.rel (0) target = $region13
    $region12: #{_ffnn_apply.1} parent=1 // pred_region
      _
    $region13: #{_ffnn_apply.1} parent=1 // pred_fallthru
      _
    // Predicated region
    $region14: #{_ffnn_apply.1} parent=1 // pred_check
      _
    $region15: #{_ffnn_apply.1} parent=1 // pred_check_branch
      %21 = sbr.rel (0) target = $region17
    $region16: #{_ffnn_apply.1} parent=1 // pred_region
      %23 = vsyncadd [#allocation3], 0
      %s24 = sshll.u32 %s3, 4
      %s25 = int_to_ptr.hbm [resolvable:$true] %s24
      %s26 = sshll.u32 [#allocation2], 4
      %s27 = int_to_ptr.vmem [resolvable:$true] %s26
      %32 = dma.hbm_to_vmem [thread:$0]  %s25, 1024, %s27, [#allocation3], 64, 64, 4
    $region17: #{_ffnn_apply.1} parent=1 // pred_fallthru
      _
    // Predicated region
    $region18: #{_ffnn_apply.1} parent=1 // pred_check
      _
    $region19: #{_ffnn_apply.1} parent=1 // pred_check_branch
      %34 = sbr.rel (0) target = $region21
    $region20: #{_ffnn_apply.1} parent=1 // pred_region
      _
    $region21: #{_ffnn_apply.1} parent=1 // pred_fallthru
      _
    // Predicated region
    $region22: #{_ffnn_apply.1} parent=1 // pred_check
      _
    $region23: #{_ffnn_apply.1} parent=1 // pred_check_branch
      %36 = sbr.rel (0) target = $region25
    $region24: #{_ffnn_apply.1} parent=1 // pred_region
      %38 = vsyncadd [#allocation5], 0
      %s39 = sshll.u32 %s5, 4
      %s40 = int_to_ptr.hbm [resolvable:$true] %s39
      %s41 = sshll.u32 [#allocation4], 4
      %s42 = int_to_ptr.vmem [resolvable:$true] %s41
      %47 = dma.hbm_to_vmem [thread:$0]  %s40, 1024, %s42, [#allocation5], 64, 64, 4
    $region25: #{_ffnn_apply.1} parent=1 // pred_fallthru
      _
    // Predicated region
    $region26: #{_ffnn_apply.1} parent=1 // pred_check
      _
    $region27: #{_ffnn_apply.1} parent=1 // pred_check_branch
      %49 = sbr.rel (0) target = $region29
    $region28: #{_ffnn_apply.1} parent=1 // pred_region
      _
    $region29: #{_ffnn_apply.1} parent=1 // pred_fallthru
      _
    // Predicated region
    $region30: #{_ffnn_apply.1} parent=1 // pred_check
      _
    $region31: #{_ffnn_apply.1} parent=1 // pred_check_branch
      %51 = sbr.rel (0) target = $region33
    $region32: #{_ffnn_apply.1} parent=1 // pred_region
      %53 = dma.done [#allocation3], 1024
    $region33: #{_ffnn_apply.1} parent=1 // pred_fallthru
      _
    // Predicated region
    $region34: #{_ffnn_apply.1} parent=1 // pred_check
      _
    $region35: #{_ffnn_apply.1} parent=1 // pred_check_branch
      %55 = sbr.rel (0) target = $region37
    $region36: #{_ffnn_apply.1} parent=1 // pred_region
      %57 = dma.done [#allocation5], 1024
    $region37: #{_ffnn_apply.1} parent=1 // pred_fallthru
      _
    %v58 = vld [vmem:[%s0] sm:$0xf]
    %v59 = vld [vmem:[%s0 + $0x4] sm:$0xf]
    %v60 = vld [vmem:[%s0 + $0x8] sm:$0xf]
    %v61 = vld [vmem:[%s0 + $0xc] sm:$0xf]
    %v62 = vld [vmem:[%s1] sm:$0xf]
    %v63 = vld [vmem:[%s1 + $0x4] sm:$0xf]
    %v64 = vld [vmem:[%s1 + $0x8] sm:$0xf]
    %v65 = vld [vmem:[%s1 + $0xc] sm:$0xf]
    %v66 = vld [vmem:[%s1 + $0x10] sm:$0xf]
    %v67 = vld [vmem:[%s1 + $0x14] sm:$0xf]
    %v68 = vld [vmem:[%s1 + $0x18] sm:$0xf]
    %v69 = vld [vmem:[%s1 + $0x1c] sm:$0xf]
    %v70 = vld [vmem:[%s1 + $0x20] sm:$0xf]
    %v71 = vld [vmem:[%s1 + $0x24] sm:$0xf]
    %v72 = vld [vmem:[%s1 + $0x28] sm:$0xf]
    %v73 = vld [vmem:[%s1 + $0x2c] sm:$0xf]
    %v74 = vld [vmem:[%s1 + $0x30] sm:$0xf]
    %v75 = vld [vmem:[%s1 + $0x34] sm:$0xf]
    %v76 = vld [vmem:[%s1 + $0x38] sm:$0xf]
    %v77 = vld [vmem:[%s1 + $0x3c] sm:$0xf]
    %v78 = vld [vmem:[%s2] sm:$0x1]
    %v80 = vperm.slane %v78, 0
    %v86 = vunpack.c.l.b16 %v58
    %v87 = vunpack.c.l.b16 %v59
    %v88 = vunpack.c.l.b16 %v60
    %v89 = vunpack.c.l.b16 %v61
    %v90 = vpack.c.b16 %v87, %v86
    %v91 = vpack.c.b16 %v89, %v88
    %v110 = vunpack.c.l.b16 %v62
    %v111 = vunpack.c.l.b16 %v63
    %v112 = vunpack.c.l.b16 %v64
    %v113 = vunpack.c.l.b16 %v65
    %v114 = vunpack.c.l.b16 %v66
    %v115 = vunpack.c.l.b16 %v67
    %v116 = vunpack.c.l.b16 %v68
    %v117 = vunpack.c.l.b16 %v69
    %v118 = vunpack.c.l.b16 %v70
    %v119 = vunpack.c.l.b16 %v71
    %v120 = vunpack.c.l.b16 %v72
    %v121 = vunpack.c.l.b16 %v73
    %v122 = vunpack.c.l.b16 %v74
    %v123 = vunpack.c.l.b16 %v75
    %v124 = vunpack.c.l.b16 %v76
    %v125 = vunpack.c.l.b16 %v77
    %v126 = vpack.c.b16 %v111, %v110
    %v127 = vpack.c.b16 %v113, %v112
    %v128 = vpack.c.b16 %v115, %v114
    %v129 = vpack.c.b16 %v117, %v116
    %v130 = vpack.c.b16 %v119, %v118
    %v131 = vpack.c.b16 %v121, %v120
    %v132 = vpack.c.b16 %v123, %v122
    %v133 = vpack.c.b16 %v125, %v124
    %142 = vmatpush.bf16.msra.mxu0 %v133
    %143 = vmatpush.bf16.msra.mxu0 %v132
    %144 = vmatpush.bf16.msra.mxu0 %v131
    %145 = vmatpush.bf16.msra.mxu0 %v130
    %146 = vmatpush.bf16.msra.mxu0 %v129
    %147 = vmatpush.bf16.msra.mxu0 %v128
    %148 = vmatpush.bf16.msra.mxu0 %v127
    %149 = vmatpush.bf16.msra.mxu0 %v126
    %150 = vmatmul.bf16.gmra.mxu0 %v90
    %v151 = vpop.f32.mrf.mxu0
    %v152 = vadd.f32 %v80, %v151
    %v153 = vpop.f32.mrf.mxu0
    %v154 = vadd.f32 %v80, %v153
    %155 = vmatmul.bf16.gmra.mxu0 %v91
    %v156 = vpop.f32.mrf.mxu0
    %v157 = vadd.f32 %v80, %v156
    %v158 = vpop.f32.mrf.mxu0
    %v159 = vadd.f32 %v80, %v158
    %160 = vdwg.mxu0
    %v161 = vmax.f32 %v152, 0.0
    %v162 = vmax.f32 %v154, 0.0
    %v163 = vmax.f32 %v157, 0.0
    %v164 = vmax.f32 %v159, 0.0
    %v165 = vpack.c.bf16 %v162, %v161
    %v166 = vpack.c.bf16 %v164, %v163
    %v167 = vld [vmem:[#allocation2] sm:$0xf]
    %v168 = vld [vmem:[#allocation2 + $0x4] sm:$0xf]
    %v169 = vld [vmem:[#allocation2 + $0x8] sm:$0xf]
    %v170 = vld [vmem:[#allocation2 + $0xc] sm:$0xf]
    %v171 = vld [vmem:[#allocation2 + $0x10] sm:$0xf]
    %v172 = vld [vmem:[#allocation2 + $0x14] sm:$0xf]
    %v173 = vld [vmem:[#allocation2 + $0x18] sm:$0xf]
    %v174 = vld [vmem:[#allocation2 + $0x1c] sm:$0xf]
    %v175 = vld [vmem:[#allocation2 + $0x20] sm:$0xf]
    %v176 = vld [vmem:[#allocation2 + $0x24] sm:$0xf]
    %v177 = vld [vmem:[#allocation2 + $0x28] sm:$0xf]
    %v178 = vld [vmem:[#allocation2 + $0x2c] sm:$0xf]
    %v179 = vld [vmem:[#allocation2 + $0x30] sm:$0xf]
    %v180 = vld [vmem:[#allocation2 + $0x34] sm:$0xf]
    %v181 = vld [vmem:[#allocation2 + $0x38] sm:$0xf]
    %v182 = vld [vmem:[#allocation2 + $0x3c] sm:$0xf]
    %v183 = vld [vmem:[%s4] sm:$0x1]
    %v185 = vperm.slane %v183, 0
    %v203 = vunpack.c.l.b16 %v167
    %v204 = vunpack.c.l.b16 %v168
    %v205 = vunpack.c.l.b16 %v169
    %v206 = vunpack.c.l.b16 %v170
    %v207 = vunpack.c.l.b16 %v171
    %v208 = vunpack.c.l.b16 %v172
    %v209 = vunpack.c.l.b16 %v173
    %v210 = vunpack.c.l.b16 %v174
    %v211 = vunpack.c.l.b16 %v175
    %v212 = vunpack.c.l.b16 %v176
    %v213 = vunpack.c.l.b16 %v177
    %v214 = vunpack.c.l.b16 %v178
    %v215 = vunpack.c.l.b16 %v179
    %v216 = vunpack.c.l.b16 %v180
    %v217 = vunpack.c.l.b16 %v181
    %v218 = vunpack.c.l.b16 %v182
    %v219 = vpack.c.b16 %v204, %v203
    %v220 = vpack.c.b16 %v206, %v205
    %v221 = vpack.c.b16 %v208, %v207
    %v222 = vpack.c.b16 %v210, %v209
    %v223 = vpack.c.b16 %v212, %v211
    %v224 = vpack.c.b16 %v214, %v213
    %v225 = vpack.c.b16 %v216, %v215
    %v226 = vpack.c.b16 %v218, %v217
    %235 = vmatpush.bf16.msra.mxu0 %v226
    %236 = vmatpush.bf16.msra.mxu0 %v225
    %237 = vmatpush.bf16.msra.mxu0 %v224
    %238 = vmatpush.bf16.msra.mxu0 %v223
    %239 = vmatpush.bf16.msra.mxu0 %v222
    %240 = vmatpush.bf16.msra.mxu0 %v221
    %241 = vmatpush.bf16.msra.mxu0 %v220
    %242 = vmatpush.bf16.msra.mxu0 %v219
    %243 = vmatmul.bf16.gmra.mxu0 %v165
    %v244 = vpop.f32.mrf.mxu0
    %v245 = vadd.f32 %v185, %v244
    %v246 = vpop.f32.mrf.mxu0
    %v247 = vadd.f32 %v185, %v246
    %248 = vmatmul.bf16.gmra.mxu0 %v166
    %v249 = vpop.f32.mrf.mxu0
    %v250 = vadd.f32 %v185, %v249
    %v251 = vpop.f32.mrf.mxu0
    %v252 = vadd.f32 %v185, %v251
    %253 = vdwg.mxu0
    %v254 = vmax.f32 %v245, 0.0
    %v255 = vmax.f32 %v247, 0.0
    %v256 = vmax.f32 %v250, 0.0
    %v257 = vmax.f32 %v252, 0.0
    %v258 = vpack.c.bf16 %v255, %v254
    %v259 = vpack.c.bf16 %v257, %v256
    %v260 = vld [vmem:[#allocation4] sm:$0xf]
    %v261 = vld [vmem:[#allocation4 + $0x4] sm:$0xf]
    %v262 = vld [vmem:[#allocation4 + $0x8] sm:$0xf]
    %v263 = vld [vmem:[#allocation4 + $0xc] sm:$0xf]
    %v264 = vld [vmem:[#allocation4 + $0x10] sm:$0xf]
    %v265 = vld [vmem:[#allocation4 + $0x14] sm:$0xf]
    %v266 = vld [vmem:[#allocation4 + $0x18] sm:$0xf]
    %v267 = vld [vmem:[#allocation4 + $0x1c] sm:$0xf]
    %v268 = vld [vmem:[#allocation4 + $0x20] sm:$0xf]
    %v269 = vld [vmem:[#allocation4 + $0x24] sm:$0xf]
    %v270 = vld [vmem:[#allocation4 + $0x28] sm:$0xf]
    %v271 = vld [vmem:[#allocation4 + $0x2c] sm:$0xf]
    %v272 = vld [vmem:[#allocation4 + $0x30] sm:$0xf]
    %v273 = vld [vmem:[#allocation4 + $0x34] sm:$0xf]
    %v274 = vld [vmem:[#allocation4 + $0x38] sm:$0xf]
    %v275 = vld [vmem:[#allocation4 + $0x3c] sm:$0xf]
    %v276 = vld [vmem:[%s6] sm:$0x1]
    %v278 = vperm.slane %v276, 0
    %v296 = vunpack.c.l.b16 %v260
    %v297 = vunpack.c.l.b16 %v261
    %v298 = vunpack.c.l.b16 %v262
    %v299 = vunpack.c.l.b16 %v263
    %v300 = vunpack.c.l.b16 %v264
    %v301 = vunpack.c.l.b16 %v265
    %v302 = vunpack.c.l.b16 %v266
    %v303 = vunpack.c.l.b16 %v267
    %v304 = vunpack.c.l.b16 %v268
    %v305 = vunpack.c.l.b16 %v269
    %v306 = vunpack.c.l.b16 %v270
    %v307 = vunpack.c.l.b16 %v271
    %v308 = vunpack.c.l.b16 %v272
    %v309 = vunpack.c.l.b16 %v273
    %v310 = vunpack.c.l.b16 %v274
    %v311 = vunpack.c.l.b16 %v275
    %v312 = vpack.c.b16 %v297, %v296
    %v313 = vpack.c.b16 %v299, %v298
    %v314 = vpack.c.b16 %v301, %v300
    %v315 = vpack.c.b16 %v303, %v302
    %v316 = vpack.c.b16 %v305, %v304
    %v317 = vpack.c.b16 %v307, %v306
    %v318 = vpack.c.b16 %v309, %v308
    %v319 = vpack.c.b16 %v311, %v310
    %328 = vmatpush.bf16.msra.mxu0 %v319
    %329 = vmatpush.bf16.msra.mxu0 %v318
    %330 = vmatpush.bf16.msra.mxu0 %v317
    %331 = vmatpush.bf16.msra.mxu0 %v316
    %332 = vmatpush.bf16.msra.mxu0 %v315
    %333 = vmatpush.bf16.msra.mxu0 %v314
    %334 = vmatpush.bf16.msra.mxu0 %v313
    %335 = vmatpush.bf16.msra.mxu0 %v312
    %336 = vmatmul.bf16.gmra.mxu0 %v258
    %v337 = vpop.f32.mrf.mxu0
    %v338 = vadd.f32 %v278, %v337
    %v339 = vpop.f32.mrf.mxu0
    %v340 = vadd.f32 %v278, %v339
    %341 = vmatmul.bf16.gmra.mxu0 %v259
    %v342 = vpop.f32.mrf.mxu0
    %v343 = vadd.f32 %v278, %v342
    %v344 = vpop.f32.mrf.mxu0
    %v345 = vadd.f32 %v278, %v344
    %346 = vdwg.mxu0
    %347 = vst [vmem:[%s7] sm:$0xff] %v338
    %348 = vst [vmem:[%s7 + $0x8] sm:$0xff] %v340
    %349 = vst [vmem:[%s7 + $0x10] sm:$0xff] %v343
    %350 = vst [vmem:[%s7 + $0x18] sm:$0xff] %v345
    // Predicated region
    $region38: #{_ffnn_apply.1} parent=1 // pred_check
      _
    $region39: #{_ffnn_apply.1} parent=1 // pred_check_branch
      %352 = sbr.rel (0) target = $region41
    $region40: #{_ffnn_apply.1} parent=1 // pred_region
      _
    $region41: #{_ffnn_apply.1} parent=1 // pred_fallthru
      _
    // Predicated region
    $region42: #{_ffnn_apply.1} parent=1 // pred_check
      _
    $region43: #{_ffnn_apply.1} parent=1 // pred_check_branch
      %354 = sbr.rel (0) target = $region45
    $region44: #{_ffnn_apply.1} parent=1 // pred_region
      _
    $region45: #{_ffnn_apply.1} parent=1 // pred_fallthru
      _
    %355 = vsyncpa [#allocation3], 1
    %356 = vsyncpa [#allocation5], 1

</llo_original>
